<compile_context>
chip_gen: v6e
topology: v6e:2x2x1
jax: 0.10.0
libtpu: 0.0.40
codegen_flags: <defaults>
</compile_context>

<pallas_src>
import jax
import jax.numpy as jnp
from jax.experimental import pallas as pl
from jax.experimental.pallas import tpu as pltpu

# ---- small synthetic shapes consistent with the module ----------------------
N = 64        # number of graph nodes (Cora: 2708; small synthetic)
F_IN = 16     # input feature dim (Cora: 1433; small synthetic)
H = 16        # conv1 output channels (SplineConv(.., 16, ...))
C = 7         # number of classes (Cora: 7)
S = 2         # kernel_size**dim = 2 basis functions (dim=1, kernel_size=2)
E = 256       # number of edges

FP = 128      # F_IN padded to a full lane width (layer-1 contraction dim)
WL = 128      # packed weight tile lane width (one vreg-wide matmul output)
BW = 16       # per-block output width (H = 16; C = 7 padded up to 16)
O0, O1, OR = 0, 32, 64   # 32-lane-aligned offsets of basis0 / basis1 / root
NEG = -1e30   # mask value for padded class lanes (folded into conv2 bias)


def net_kernel(x_ref, a_ref, w1_ref, b1_ref, w2_ref, b2_ref, o_ref,
               stack1_ref, stack2_ref):
    x = x_ref[...]          # [N, FP]   bf16
    a = a_ref[...]          # [N, S*N]  bf16, deg_inv (mean aggr) pre-folded

    # ---- conv1: one packed (basis0 | basis1 | root) matmul ------------------
    xw = jnp.dot(x, w1_ref[...], preferred_element_type=jnp.float32)   # [N, WL]
    stack1_ref[0:N, :] = xw[:, O0:O0 + BW].astype(jnp.bfloat16)
    stack1_ref[N:2 * N, :] = xw[:, O1:O1 + BW].astype(jnp.bfloat16)
    agg1 = jnp.dot(a, stack1_ref[...],
                   preferred_element_type=jnp.float32)                 # [N, BW]
    h1 = agg1 + xw[:, OR:OR + BW] + b1_ref[...]
    # ELU (f32); clamp the exp argument so the unselected branch stays finite
    h1 = jnp.where(h1 > 0, h1, jnp.exp(jnp.minimum(h1, 0.0)) - 1.0)
    h1 = h1.astype(jnp.bfloat16)                                       # [N, BW]

    # ---- conv2: one packed (basis0 | basis1 | root) matmul ------------------
    hw = jnp.dot(h1, w2_ref[...], preferred_element_type=jnp.float32)  # [N, WL]
    stack2_ref[0:N, :] = hw[:, O0:O0 + BW].astype(jnp.bfloat16)
    stack2_ref[N:2 * N, :] = hw[:, O1:O1 + BW].astype(jnp.bfloat16)
    agg2 = jnp.dot(a, stack2_ref[...],
                   preferred_element_type=jnp.float32)                 # [N, BW]
    # b2 carries -1e30 on padded class lanes -> they vanish in the softmax
    h2 = agg2 + hw[:, OR:OR + BW] + b2_ref[...]

    # ---- log_softmax over classes (dim=1) -----------------------------------
    m = jnp.max(h2, axis=1, keepdims=True)
    z = h2 - m
    lse = jnp.log(jnp.sum(jnp.exp(z), axis=1, keepdims=True))
    o_ref[...] = (z - lse).astype(o_ref.dtype)


def net_forward(x, A, deg_inv, w1, wr1, b1, w2, wr2, b2):
    # ---- wrapper-side layout plumbing: lane-dense, bf16 ----------------------
    xp = jnp.zeros((N, FP), jnp.float32).at[:, :F_IN].set(x).astype(jnp.bfloat16)

    # fold deg_inv into A (f32 row-scaling before the bf16 cast -> exact math)
    a_scaled = A * deg_inv[None, :, :]                       # [S, N, N] f32
    a_cat = jnp.concatenate([a_scaled[0], a_scaled[1]],
                            axis=1).astype(jnp.bfloat16)      # [N, S*N]

    # packed weight tiles: basis0 | basis1 | root within one 128-lane tile
    w1p = jnp.zeros((FP, WL), jnp.float32)
    w1p = w1p.at[:F_IN, O0:O0 + H].set(w1[0])
    w1p = w1p.at[:F_IN, O1:O1 + H].set(w1[1])
    w1p = w1p.at[:F_IN, OR:OR + H].set(wr1)
    w1p = w1p.astype(jnp.bfloat16)
    b1p = jnp.zeros((1, BW), jnp.float32).at[:, :H].set(b1)

    w2p = jnp.zeros((BW, WL), jnp.float32)
    w2p = w2p.at[:H, O0:O0 + C].set(w2[0])
    w2p = w2p.at[:H, O1:O1 + C].set(w2[1])
    w2p = w2p.at[:H, OR:OR + C].set(wr2)
    w2p = w2p.astype(jnp.bfloat16)
    # fold padded-class masking into the bias
    b2p = jnp.full((1, BW), NEG, jnp.float32).at[:, :C].set(b2)

    vmem = pl.BlockSpec(memory_space=pltpu.MemorySpace.VMEM)
    out = pl.pallas_call(
        net_kernel,
        out_shape=jax.ShapeDtypeStruct((N, BW), jnp.float32),
        in_specs=[vmem] * 6,
        out_specs=vmem,
        scratch_shapes=[pltpu.VMEM((S * N, BW), jnp.bfloat16),
                        pltpu.VMEM((S * N, BW), jnp.bfloat16)],
    )(xp, a_cat, w1p, b1p, w2p, b2p)
    return out[:, :C]


def build_spline_graph(key):
    """Glue: synthetic edge list + 1-D pseudo-coordinates -> dense basis-weighted
    adjacency matrices (open B-spline, degree 1, kernel_size 2)."""
    k_src, k_dst, k_attr = jax.random.split(key, 3)
    src = jax.random.randint(k_src, (E,), 0, N)
    dst = jax.random.randint(k_dst, (E,), 0, N)
    u = jax.random.uniform(k_attr, (E,), jnp.float32)  # edge_attr in [0, 1]

    A = jnp.zeros((S, N, N), jnp.float32)
    A = A.at[0, dst, src].add(1.0 - u)
    A = A.at[1, dst, src].add(u)

    deg = jnp.zeros((N,), jnp.float32).at[dst].add(1.0)
    deg_inv = (1.0 / jnp.maximum(deg, 1.0)).reshape(N, 1)
    return A, deg_inv


def reference(x, A, deg_inv, w1, wr1, b1, w2, wr2, b2):
    """Pure-JAX f32 reference of the same forward pass."""
    def spline_conv(h, w, wr, b):
        agg = sum(A[s] @ (h @ w[s]) for s in range(S)) * deg_inv
        return agg + h @ wr + b
    h1 = jax.nn.elu(spline_conv(x, w1, wr1, b1))
    h2 = spline_conv(h1, w2, wr2, b2)
    return jax.nn.log_softmax(h2, axis=1)


if __name__ == "__main__":
    key = jax.random.PRNGKey(0)
    ks = jax.random.split(key, 8)

    # deterministic synthetic inputs + parameters (SplineConv weight shapes:
    # weight [K, in, out], root [in, out], bias [out])
    x = jax.random.normal(ks[0], (N, F_IN), jnp.float32)
    A, deg_inv = build_spline_graph(ks[1])

    w1 = 0.1 * jax.random.normal(ks[2], (S, F_IN, H), jnp.float32)
    wr1 = 0.1 * jax.random.normal(ks[3], (F_IN, H), jnp.float32)
    b1 = jnp.zeros((1, H), jnp.float32)

    w2 = 0.1 * jax.random.normal(ks[4], (S, H, C), jnp.float32)
    wr2 = 0.1 * jax.random.normal(ks[5], (H, C), jnp.float32)
    b2 = jnp.zeros((1, C), jnp.float32)

    out = net_forward(x, A, deg_inv, w1, wr1, b1, w2, wr2, b2)
    out = jax.block_until_ready(out)

    assert out.shape == (N, C)
    assert bool(jnp.all(jnp.isfinite(out)))
    # valid log-probabilities: rows of exp(out) sum to 1
    row_sums = jnp.sum(jnp.exp(out), axis=1)
    assert bool(jnp.all(jnp.abs(row_sums - 1.0) < 1e-3))
    # matches the f32 reference within bf16-matmul tolerance
    ref = reference(x, A, deg_inv, w1, wr1, b1, w2, wr2, b2)
    assert bool(jnp.max(jnp.abs(out - ref)) < 0.1)

    print("KERNEL_OK")
</pallas_src>

<mosaic_0001>
module attributes {stable_mosaic.version = 11 : i64} {
  func.func @net_kernel(%arg0: memref<64x128xbf16, #tpu.memory_space<vmem>>, %arg1: memref<64x128xbf16, #tpu.memory_space<vmem>>, %arg2: memref<128x128xbf16, #tpu.memory_space<vmem>>, %arg3: memref<1x16xf32, #tpu.memory_space<vmem>>, %arg4: memref<16x128xbf16, #tpu.memory_space<vmem>>, %arg5: memref<1x16xf32, #tpu.memory_space<vmem>>, %arg6: memref<64x16xf32, #tpu.memory_space<vmem>>, %arg7: memref<128x16xbf16, #tpu.memory_space<vmem>>, %arg8: memref<128x16xbf16, #tpu.memory_space<vmem>>) attributes {dimension_semantics = [], scalar_prefetch = 0 : i64, scratch_operands = 2 : i64, tpu.core_type = #tpu.core_type<tc>} {
    %c0 = arith.constant 0 : index
    %c0_0 = arith.constant 0 : index
    %0 = vector.load %arg0[%c0, %c0_0] : memref<64x128xbf16, #tpu.memory_space<vmem>>, vector<64x128xbf16>
    %c0_1 = arith.constant 0 : index
    %c0_2 = arith.constant 0 : index
    %1 = vector.load %arg1[%c0_1, %c0_2] : memref<64x128xbf16, #tpu.memory_space<vmem>>, vector<64x128xbf16>
    %c0_3 = arith.constant 0 : index
    %c0_4 = arith.constant 0 : index
    %2 = vector.load %arg2[%c0_3, %c0_4] : memref<128x128xbf16, #tpu.memory_space<vmem>>, vector<128x128xbf16>
    %cst = arith.constant dense<0.000000e+00> : vector<64x128xf32>
    %3 = tpu.matmul %0, %2, %cst {dimension_numbers = #tpu.dot_dimension_numbers<[1], [0], [0], [1], [0, 0, 1, 1], [], []>} : vector<64x128xbf16>, vector<128x128xbf16>, vector<64x128xf32> -> vector<64x128xf32>
    %4 = vector.extract_strided_slice %3 {offsets = [0, 0], sizes = [64, 16], strides = [1, 1]} : vector<64x128xf32> to vector<64x16xf32>
    %5 = arith.truncf %4 : vector<64x16xf32> to vector<64x16xbf16>
    %c0_5 = arith.constant 0 : index
    %c0_6 = arith.constant 0 : index
    %6 = vector.load %arg7[%c0_5, %c0_6] : memref<128x16xbf16, #tpu.memory_space<vmem>>, vector<64x16xbf16>
    tpu.vector_store %arg7[%c0_5, %c0_6], %5 {strides = array<i32>} : memref<128x16xbf16, #tpu.memory_space<vmem>>, vector<64x16xbf16>,
    %7 = vector.extract_strided_slice %3 {offsets = [0, 32], sizes = [64, 16], strides = [1, 1]} : vector<64x128xf32> to vector<64x16xf32>
    %8 = arith.truncf %7 : vector<64x16xf32> to vector<64x16xbf16>
    %c64 = arith.constant 64 : index
    %c0_7 = arith.constant 0 : index
    %9 = vector.load %arg7[%c64, %c0_7] : memref<128x16xbf16, #tpu.memory_space<vmem>>, vector<64x16xbf16>
    tpu.vector_store %arg7[%c64, %c0_7], %8 {strides = array<i32>} : memref<128x16xbf16, #tpu.memory_space<vmem>>, vector<64x16xbf16>,
    %c0_8 = arith.constant 0 : index
    %c0_9 = arith.constant 0 : index
    %10 = vector.load %arg7[%c0_8, %c0_9] : memref<128x16xbf16, #tpu.memory_space<vmem>>, vector<128x16xbf16>
    %cst_10 = arith.constant dense<0.000000e+00> : vector<64x16xf32>
    %11 = tpu.matmul %1, %10, %cst_10 {dimension_numbers = #tpu.dot_dimension_numbers<[1], [0], [0], [1], [0, 0, 1, 1], [], []>} : vector<64x128xbf16>, vector<128x16xbf16>, vector<64x16xf32> -> vector<64x16xf32>
    %12 = vector.extract_strided_slice %3 {offsets = [0, 64], sizes = [64, 16], strides = [1, 1]} : vector<64x128xf32> to vector<64x16xf32>
    %13 = arith.addf %11, %12 : vector<64x16xf32>
    %c0_11 = arith.constant 0 : index
    %c0_12 = arith.constant 0 : index
    %14 = vector.load %arg3[%c0_11, %c0_12] : memref<1x16xf32, #tpu.memory_space<vmem>>, vector<1x16xf32>
    %15 = vector.broadcast %14 : vector<1x16xf32> to vector<64x16xf32>
    %16 = arith.addf %13, %15 : vector<64x16xf32>
    %cst_13 = arith.constant 0.000000e+00 : f32
    %17 = vector.broadcast %cst_13 : f32 to vector<64x16xf32>
    %18 = arith.cmpf ogt, %16, %17 : vector<64x16xf32>
    %cst_14 = arith.constant 0.000000e+00 : f32
    %19 = vector.broadcast %cst_14 : f32 to vector<64x16xf32>
    %20 = arith.minimumf %16, %19 : vector<64x16xf32>
    %21 = math.exp %20 : vector<64x16xf32>
    %cst_15 = arith.constant 1.000000e+00 : f32
    %22 = vector.broadcast %cst_15 : f32 to vector<64x16xf32>
    %23 = arith.subf %21, %22 : vector<64x16xf32>
    %24 = arith.select %18, %16, %23 : vector<64x16xi1>, vector<64x16xf32>
    %25 = arith.truncf %24 : vector<64x16xf32> to vector<64x16xbf16>
    %c0_16 = arith.constant 0 : index
    %c0_17 = arith.constant 0 : index
    %26 = vector.load %arg4[%c0_16, %c0_17] : memref<16x128xbf16, #tpu.memory_space<vmem>>, vector<16x128xbf16>
    %cst_18 = arith.constant dense<0.000000e+00> : vector<64x128xf32>
    %27 = tpu.matmul %25, %26, %cst_18 {dimension_numbers = #tpu.dot_dimension_numbers<[1], [0], [0], [1], [0, 0, 1, 1], [], []>} : vector<64x16xbf16>, vector<16x128xbf16>, vector<64x128xf32> -> vector<64x128xf32>
    %28 = vector.extract_strided_slice %27 {offsets = [0, 0], sizes = [64, 16], strides = [1, 1]} : vector<64x128xf32> to vector<64x16xf32>
    %29 = arith.truncf %28 : vector<64x16xf32> to vector<64x16xbf16>
    %c0_19 = arith.constant 0 : index
    %c0_20 = arith.constant 0 : index
    %30 = vector.load %arg8[%c0_19, %c0_20] : memref<128x16xbf16, #tpu.memory_space<vmem>>, vector<64x16xbf16>
    tpu.vector_store %arg8[%c0_19, %c0_20], %29 {strides = array<i32>} : memref<128x16xbf16, #tpu.memory_space<vmem>>, vector<64x16xbf16>,
    %31 = vector.extract_strided_slice %27 {offsets = [0, 32], sizes = [64, 16], strides = [1, 1]} : vector<64x128xf32> to vector<64x16xf32>
    %32 = arith.truncf %31 : vector<64x16xf32> to vector<64x16xbf16>
    %c64_21 = arith.constant 64 : index
    %c0_22 = arith.constant 0 : index
    %33 = vector.load %arg8[%c64_21, %c0_22] : memref<128x16xbf16, #tpu.memory_space<vmem>>, vector<64x16xbf16>
    tpu.vector_store %arg8[%c64_21, %c0_22], %32 {strides = array<i32>} : memref<128x16xbf16, #tpu.memory_space<vmem>>, vector<64x16xbf16>,
    %c0_23 = arith.constant 0 : index
    %c0_24 = arith.constant 0 : index
    %34 = vector.load %arg8[%c0_23, %c0_24] : memref<128x16xbf16, #tpu.memory_space<vmem>>, vector<128x16xbf16>
    %cst_25 = arith.constant dense<0.000000e+00> : vector<64x16xf32>
    %35 = tpu.matmul %1, %34, %cst_25 {dimension_numbers = #tpu.dot_dimension_numbers<[1], [0], [0], [1], [0, 0, 1, 1], [], []>} : vector<64x128xbf16>, vector<128x16xbf16>, vector<64x16xf32> -> vector<64x16xf32>
    %36 = vector.extract_strided_slice %27 {offsets = [0, 64], sizes = [64, 16], strides = [1, 1]} : vector<64x128xf32> to vector<64x16xf32>
    %37 = arith.addf %35, %36 : vector<64x16xf32>
    %c0_26 = arith.constant 0 : index
    %c0_27 = arith.constant 0 : index
    %38 = vector.load %arg5[%c0_26, %c0_27] : memref<1x16xf32, #tpu.memory_space<vmem>>, vector<1x16xf32>
    %39 = vector.broadcast %38 : vector<1x16xf32> to vector<64x16xf32>
    %40 = arith.addf %37, %39 : vector<64x16xf32>
    %cst_28 = arith.constant dense<0xFF800000> : vector<64xf32>
    %41 = vector.multi_reduction <maximumf>, %40, %cst_28 [1] : vector<64x16xf32> to vector<64xf32>
    %42 = vector.shape_cast %41 : vector<64xf32> to vector<64x1xf32>
    %43 = vector.broadcast %42 : vector<64x1xf32> to vector<64x16xf32>
    %44 = arith.subf %40, %43 : vector<64x16xf32>
    %45 = math.exp %44 : vector<64x16xf32>
    %cst_29 = arith.constant dense<0.000000e+00> : vector<64xf32>
    %46 = vector.multi_reduction <add>, %45, %cst_29 [1] : vector<64x16xf32> to vector<64xf32>
    %47 = vector.shape_cast %46 : vector<64xf32> to vector<64x1xf32>
    %48 = math.log %47 : vector<64x1xf32>
    %49 = vector.broadcast %48 : vector<64x1xf32> to vector<64x16xf32>
    %50 = arith.subf %44, %49 : vector<64x16xf32>
    %c0_30 = arith.constant 0 : index
    %c0_31 = arith.constant 0 : index
    %51 = vector.load %arg6[%c0_30, %c0_31] : memref<64x16xf32, #tpu.memory_space<vmem>>, vector<64x16xf32>
    tpu.vector_store %arg6[%c0_30, %c0_31], %50 {strides = array<i32>} : memref<64x16xf32, #tpu.memory_space<vmem>>, vector<64x16xf32>,
    return
  }
}

</mosaic_0001>

<llo_original>
// kernel: tpu_custom_call.1
$region0: #{tpu_custom_call.1}
  #allocation0 [shape = 'u32[]', space=smem, size = 0x4, offset = 0x4, fixed_abs, tag = 'smem constant byte address 0x4 - core index']
  #allocation1 [shape = 'u32[144,128]{1,0:T(1,128)}', space=vmem, size = 0x12000, scoped, tag = 'internal scratch']
  #allocation2 [shape = 'bf16[128,16]{1,0:T(8,128)(2,1)}', space=vmem, size = 0x8000, scoped, tag = 'scratch operand']
  #allocation3 [shape = 'bf16[128,16]{1,0:T(8,128)(2,1)}', space=vmem, size = 0x8000, scoped, tag = 'scratch operand']
  %s0 = inlined_call_operand.hbm [shape: bf16[64,128], index: 0, kind: input, shape index: {}]
  %s1 = inlined_call_operand.hbm [shape: bf16[64,128], index: 1, kind: input, shape index: {}]
  %s2 = inlined_call_operand.hbm [shape: bf16[128,128], index: 2, kind: input, shape index: {}]
  %s3 = inlined_call_operand.vmem [shape: f32[1,16], index: 3, kind: input, shape index: {}]
  %s4 = inlined_call_operand.hbm [shape: bf16[16,128], index: 4, kind: input, shape index: {}]
  %s5 = inlined_call_operand.vmem [shape: f32[1,16], index: 5, kind: input, shape index: {}]
  %s6 = inlined_call_operand.vmem [shape: f32[64,16], index: 6, kind: output, shape index: {}]
  %s7 = sld [smem:[#allocation0]]
  $region50: #{tpu_custom_call.1} parent=0
    _
  %s9 = ssub.s32 1, %s7
  %s10 = scalar_select 0, %s9, %s7
  $region1: #{tpu_custom_call.1} parent=0
    #allocation4 [shape = 'u8[16384]{0}', space=vmem, size = 0x4000, scoped, tag = 'input window, operand 0, single buffered']
    #allocation5 [shape = 's32[1]{0}', space=sflag, size = 0x4, scoped, tag = 'scoped memory for tpu_custom_call.1']
    #allocation6 [shape = 'u8[16384]{0}', space=vmem, size = 0x4000, scoped, tag = 'input window, operand 1, single buffered']
    #allocation7 [shape = 's32[1]{0}', space=sflag, size = 0x4, scoped, tag = 'scoped memory for tpu_custom_call.1']
    #allocation8 [shape = 'u8[32768]{0}', space=vmem, size = 0x8000, scoped, tag = 'input window, operand 2, single buffered']
    #allocation9 [shape = 'u8[4096]{0}', space=vmem, size = 0x1000, scoped, tag = 'input window, operand 4, single buffered']
    #allocation10 [shape = 's32[1]{0}', space=sflag, size = 0x4, scoped, tag = 'scoped memory for tpu_custom_call.1']
    %11 = vsyncpa [#allocation5], 0
    %12 = vsyncpa [#allocation7], 0
    %13 = vsyncpa [#allocation10], 0
    // Predicated region
    $region2: #{tpu_custom_call.1} parent=1 // pred_check
      _
    $region3: #{tpu_custom_call.1} parent=1 // pred_check_branch
      %15 = sbr.rel (0) target = $region5
    $region4: #{tpu_custom_call.1} parent=1 // pred_region
      %s17 = ssub.s32 512, 512
      %18 = vsyncadd [#allocation5], %s17
      %s19 = sshll.u32 [#allocation4], 4
      %s20 = int_to_ptr.vmem [resolvable:$true] %s19
      %25 = dma.hbm_to_vmem [thread:$0]  %s0, 512, %s20, [#allocation5], 64, 64, 4
    $region5: #{tpu_custom_call.1} parent=1 // pred_fallthru
      _
    // Predicated region
    $region6: #{tpu_custom_call.1} parent=1 // pred_check
      _
    $region7: #{tpu_custom_call.1} parent=1 // pred_check_branch
      %27 = sbr.rel (0) target = $region9
    $region8: #{tpu_custom_call.1} parent=1 // pred_region
      %s29 = ssub.s32 512, 512
      %30 = vsyncadd [#allocation7], %s29
      %s31 = sshll.u32 [#allocation6], 4
      %s32 = int_to_ptr.vmem [resolvable:$true] %s31
      %37 = dma.hbm_to_vmem [thread:$0]  %s1, 512, %s32, [#allocation7], 64, 64, 4
    $region9: #{tpu_custom_call.1} parent=1 // pred_fallthru
      _
    // Predicated region
    $region10: #{tpu_custom_call.1} parent=1 // pred_check
      _
    $region11: #{tpu_custom_call.1} parent=1 // pred_check_branch
      %39 = sbr.rel (0) target = $region13
    $region12: #{tpu_custom_call.1} parent=1 // pred_region
      %s41 = ssub.s32 1024, 1024
      %42 = vsyncadd [#allocation7], %s41
      %s43 = sshll.u32 [#allocation8], 4
      %s44 = int_to_ptr.vmem [resolvable:$true] %s43
      %49 = dma.hbm_to_vmem [thread:$0]  %s2, 1024, %s44, [#allocation7], 64, 64, 4
    $region13: #{tpu_custom_call.1} parent=1 // pred_fallthru
      _
    // Predicated region
    $region14: #{tpu_custom_call.1} parent=1 // pred_check
      _
    $region15: #{tpu_custom_call.1} parent=1 // pred_check_branch
      %51 = sbr.rel (0) target = $region17
    $region16: #{tpu_custom_call.1} parent=1 // pred_region
      _
    $region17: #{tpu_custom_call.1} parent=1 // pred_fallthru
      _
    // Predicated region
    $region18: #{tpu_custom_call.1} parent=1 // pred_check
      _
    $region19: #{tpu_custom_call.1} parent=1 // pred_check_branch
      %53 = sbr.rel (0) target = $region21
    $region20: #{tpu_custom_call.1} parent=1 // pred_region
      %s55 = ssub.s32 128, 128
      %56 = vsyncadd [#allocation10], %s55
      %s57 = sshll.u32 [#allocation9], 4
      %s58 = int_to_ptr.vmem [resolvable:$true] %s57
      %63 = dma.hbm_to_vmem [thread:$0]  %s4, 128, %s58, [#allocation10], 64, 64, 4
    $region21: #{tpu_custom_call.1} parent=1 // pred_fallthru
      _
    // Predicated region
    $region22: #{tpu_custom_call.1} parent=1 // pred_check
      _
    $region23: #{tpu_custom_call.1} parent=1 // pred_check_branch
      %65 = sbr.rel (0) target = $region25
    $region24: #{tpu_custom_call.1} parent=1 // pred_region
      _
    $region25: #{tpu_custom_call.1} parent=1 // pred_fallthru
      _
    // Predicated region
    $region26: #{tpu_custom_call.1} parent=1 // pred_check
      _
    $region27: #{tpu_custom_call.1} parent=1 // pred_check_branch
      %67 = sbr.rel (0) target = $region29
    $region28: #{tpu_custom_call.1} parent=1 // pred_region
      %68 = dma.done [#allocation5], 512
    $region29: #{tpu_custom_call.1} parent=1 // pred_fallthru
      _
    // Predicated region
    $region30: #{tpu_custom_call.1} parent=1 // pred_check
      _
    $region31: #{tpu_custom_call.1} parent=1 // pred_check_branch
      %70 = sbr.rel (0) target = $region33
    $region32: #{tpu_custom_call.1} parent=1 // pred_region
      %71 = dma.done [#allocation7], 512
    $region33: #{tpu_custom_call.1} parent=1 // pred_fallthru
      _
    // Predicated region
    $region34: #{tpu_custom_call.1} parent=1 // pred_check
      _
    $region35: #{tpu_custom_call.1} parent=1 // pred_check_branch
      %73 = sbr.rel (0) target = $region37
    $region36: #{tpu_custom_call.1} parent=1 // pred_region
      %74 = dma.done [#allocation7], 1024
    $region37: #{tpu_custom_call.1} parent=1 // pred_fallthru
      _
    // Predicated region
    $region38: #{tpu_custom_call.1} parent=1 // pred_check
      _
    $region39: #{tpu_custom_call.1} parent=1 // pred_check_branch
      %76 = sbr.rel (0) target = $region41
    $region40: #{tpu_custom_call.1} parent=1 // pred_region
      %77 = dma.done [#allocation10], 128
    $region41: #{tpu_custom_call.1} parent=1 // pred_fallthru
      _
    %v79 = vld [vmem:[#allocation4] sm:$0xf]
    %v80 = vld [vmem:[#allocation4 + $0x4] sm:$0xf]
    %v81 = vld [vmem:[#allocation4 + $0x8] sm:$0xf]
    %v82 = vld [vmem:[#allocation4 + $0xc] sm:$0xf]
    %v83 = vld [vmem:[#allocation4 + $0x10] sm:$0xf]
    %v84 = vld [vmem:[#allocation4 + $0x14] sm:$0xf]
    %v85 = vld [vmem:[#allocation4 + $0x18] sm:$0xf]
    %v86 = vld [vmem:[#allocation4 + $0x1c] sm:$0xf]
    %v87 = vld [vmem:[#allocation6] sm:$0xf]
    %v88 = vld [vmem:[#allocation6 + $0x4] sm:$0xf]
    %v89 = vld [vmem:[#allocation6 + $0x8] sm:$0xf]
    %v90 = vld [vmem:[#allocation6 + $0xc] sm:$0xf]
    %v91 = vld [vmem:[#allocation6 + $0x10] sm:$0xf]
    %v92 = vld [vmem:[#allocation6 + $0x14] sm:$0xf]
    %v93 = vld [vmem:[#allocation6 + $0x18] sm:$0xf]
    %v94 = vld [vmem:[#allocation6 + $0x1c] sm:$0xf]
    %v95 = vld [vmem:[#allocation8] sm:$0xf]
    %v96 = vld [vmem:[#allocation8 + $0x4] sm:$0xf]
    %v97 = vld [vmem:[#allocation8 + $0x8] sm:$0xf]
    %v98 = vld [vmem:[#allocation8 + $0xc] sm:$0xf]
    %v99 = vld [vmem:[#allocation8 + $0x10] sm:$0xf]
    %v100 = vld [vmem:[#allocation8 + $0x14] sm:$0xf]
    %v101 = vld [vmem:[#allocation8 + $0x18] sm:$0xf]
    %v102 = vld [vmem:[#allocation8 + $0x1c] sm:$0xf]
    %v103 = vld [vmem:[#allocation8 + $0x20] sm:$0xf]
    %v104 = vld [vmem:[#allocation8 + $0x24] sm:$0xf]
    %v105 = vld [vmem:[#allocation8 + $0x28] sm:$0xf]
    %v106 = vld [vmem:[#allocation8 + $0x2c] sm:$0xf]
    %v107 = vld [vmem:[#allocation8 + $0x30] sm:$0xf]
    %v108 = vld [vmem:[#allocation8 + $0x34] sm:$0xf]
    %v109 = vld [vmem:[#allocation8 + $0x38] sm:$0xf]
    %v110 = vld [vmem:[#allocation8 + $0x3c] sm:$0xf]
    %v119 = vunpack.c.l.b16 %v79
    %v120 = vunpack.c.l.b16 %v80
    %v121 = vunpack.c.l.b16 %v81
    %v122 = vunpack.c.l.b16 %v82
    %v123 = vunpack.c.l.b16 %v83
    %v124 = vunpack.c.l.b16 %v84
    %v125 = vunpack.c.l.b16 %v85
    %v126 = vunpack.c.l.b16 %v86
    %v127 = vpack.c.b16 %v120, %v119
    %v128 = vpack.c.b16 %v122, %v121
    %v129 = vpack.c.b16 %v124, %v123
    %v130 = vpack.c.b16 %v126, %v125
    %v151 = vunpack.c.l.b16 %v95
    %v152 = vunpack.c.l.b16 %v96
    %v153 = vunpack.c.l.b16 %v97
    %v154 = vunpack.c.l.b16 %v98
    %v155 = vunpack.c.l.b16 %v99
    %v156 = vunpack.c.l.b16 %v100
    %v157 = vunpack.c.l.b16 %v101
    %v158 = vunpack.c.l.b16 %v102
    %v159 = vunpack.c.l.b16 %v103
    %v160 = vunpack.c.l.b16 %v104
    %v161 = vunpack.c.l.b16 %v105
    %v162 = vunpack.c.l.b16 %v106
    %v163 = vunpack.c.l.b16 %v107
    %v164 = vunpack.c.l.b16 %v108
    %v165 = vunpack.c.l.b16 %v109
    %v166 = vunpack.c.l.b16 %v110
    %v167 = vpack.c.b16 %v152, %v151
    %v168 = vpack.c.b16 %v154, %v153
    %v169 = vpack.c.b16 %v156, %v155
    %v170 = vpack.c.b16 %v158, %v157
    %v171 = vpack.c.b16 %v160, %v159
    %v172 = vpack.c.b16 %v162, %v161
    %v173 = vpack.c.b16 %v164, %v163
    %v174 = vpack.c.b16 %v166, %v165
    %183 = vmatprep.subr.bf16.mxu0 0
    %184 = vmatpush1.bf16.msra.mxu0 %v174
    %185 = vmatprep.subr.bf16.mxu0 0
    %186 = vmatpush1.bf16.msra.mxu0 %v173
    %187 = vmatprep.subr.bf16.mxu0 0
    %188 = vmatpush1.bf16.msra.mxu0 %v172
    %189 = vmatprep.subr.bf16.mxu0 0
    %190 = vmatpush1.bf16.msra.mxu0 %v171
    %191 = vmatprep.subr.bf16.mxu0 0
    %192 = vmatpush1.bf16.msra.mxu0 %v170
    %193 = vmatprep.subr.bf16.mxu0 0
    %194 = vmatpush1.bf16.msra.mxu0 %v169
    %195 = vmatprep.subr.bf16.mxu0 0
    %196 = vmatpush1.bf16.msra.mxu0 %v168
    %197 = vmatprep.subr.bf16.mxu0 0
    %198 = vmatpush1.bf16.msra.mxu0 %v167
    %199 = vmatprep.subr.bf16.mxu0 0
    %200 = vmatpush2.bf16.msra.mxu0 0
    %201 = vmatprep.subr.bf16.mxu0 0
    %202 = vmatpush2.bf16.msra.mxu0 0
    %203 = vmatprep.subr.bf16.mxu0 0
    %204 = vmatpush2.bf16.msra.mxu0 0
    %205 = vmatprep.subr.bf16.mxu0 0
    %206 = vmatpush2.bf16.msra.mxu0 0
    %207 = vmatprep.subr.bf16.mxu0 0
    %208 = vmatpush2.bf16.msra.mxu0 0
    %209 = vmatprep.subr.bf16.mxu0 0
    %210 = vmatpush2.bf16.msra.mxu0 0
    %211 = vmatprep.subr.bf16.mxu0 0
    %212 = vmatpush2.bf16.msra.mxu0 0
    %213 = vmatprep.subr.bf16.mxu0 0
    %214 = vmatpush2.bf16.msra.mxu0 0
    %215 = vmatprep.mubr.bf16.mxu0 0
    %216 = vmatmul.mubr.bf16.gmra.mxu0 %v127
    %v217 = vpop.f32.mrf.mxu0
    %v218 = vadd.f32 0.0, %v217
    %v219 = vpop.f32.mrf.mxu0
    %v220 = vpop.f32.mrf.mxu0
    %v221 = vadd.f32 0.0, %v220
    %v222 = vpop.f32.mrf.mxu0
    %223 = vmatprep.mubr.bf16.mxu0 0
    %224 = vmatmul.mubr.bf16.gmra.mxu0 %v128
    %v225 = vpop.f32.mrf.mxu0
    %v226 = vadd.f32 0.0, %v225
    %v227 = vpop.f32.mrf.mxu0
    %v228 = vpop.f32.mrf.mxu0
    %v229 = vadd.f32 0.0, %v228
    %v230 = vpop.f32.mrf.mxu0
    %231 = vmatprep.mubr.bf16.mxu0 0
    %232 = vmatmul.mubr.bf16.gmra.mxu0 %v129
    %v233 = vpop.f32.mrf.mxu0
    %v234 = vadd.f32 0.0, %v233
    %v235 = vpop.f32.mrf.mxu0
    %v236 = vpop.f32.mrf.mxu0
    %v237 = vadd.f32 0.0, %v236
    %v238 = vpop.f32.mrf.mxu0
    %239 = vmatprep.mubr.bf16.mxu0 0
    %240 = vmatmul.mubr.bf16.gmra.mxu0 %v130
    %v241 = vpop.f32.mrf.mxu0
    %v242 = vadd.f32 0.0, %v241
    %v243 = vpop.f32.mrf.mxu0
    %v244 = vpop.f32.mrf.mxu0
    %v245 = vadd.f32 0.0, %v244
    %v246 = vpop.f32.mrf.mxu0
    %247 = vdwg.mxu0
    %v248 = vpack.c.bf16 %v221, %v218
    %v249 = vpack.c.bf16 %v229, %v226
    %v250 = vpack.c.bf16 %v237, %v234
    %v251 = vpack.c.bf16 %v245, %v242
    %v256 = vunpack.c.l.b16 %v248
    %v257 = vunpack.c.h.b16 %v248
    %v258 = vunpack.c.l.b16 %v249
    %v259 = vunpack.c.h.b16 %v249
    %v260 = vunpack.c.l.b16 %v250
    %v261 = vunpack.c.h.b16 %v250
    %v262 = vunpack.c.l.b16 %v251
    %v263 = vunpack.c.h.b16 %v251
    %v264 = vpack.c.b16 %v256, %v256
    %v265 = vpack.c.b16 %v257, %v257
    %v266 = vpack.c.b16 %v258, %v258
    %v267 = vpack.c.b16 %v259, %v259
    %v268 = vpack.c.b16 %v260, %v260
    %v269 = vpack.c.b16 %v261, %v261
    %v270 = vpack.c.b16 %v262, %v262
    %v271 = vpack.c.b16 %v263, %v263
    %vm280 = vcmask 125952
    %281 = vst.msk [vmem:[#allocation2] sm:$0xf] %vm280, %v264
    %282 = vst.msk [vmem:[#allocation2 + $0x4] sm:$0xf] %vm280, %v265
    %283 = vst.msk [vmem:[#allocation2 + $0x8] sm:$0xf] %vm280, %v266
    %284 = vst.msk [vmem:[#allocation2 + $0xc] sm:$0xf] %vm280, %v267
    %285 = vst.msk [vmem:[#allocation2 + $0x10] sm:$0xf] %vm280, %v268
    %286 = vst.msk [vmem:[#allocation2 + $0x14] sm:$0xf] %vm280, %v269
    %287 = vst.msk [vmem:[#allocation2 + $0x18] sm:$0xf] %vm280, %v270
    %288 = vst.msk [vmem:[#allocation2 + $0x1c] sm:$0xf] %vm280, %v271
    %289 = vrot.lane.b32.xlu0 %v264, 96
    %v290 = vpop.permute.xlu0 %289
    %291 = vrot.lane.b32.xlu0 %v265, 96
    %v292 = vpop.permute.xlu0 %291
    %293 = vrot.lane.b32.xlu0 %v266, 96
    %v294 = vpop.permute.xlu0 %293
    %295 = vrot.lane.b32.xlu0 %v267, 96
    %v296 = vpop.permute.xlu0 %295
    %297 = vrot.lane.b32.xlu0 %v268, 96
    %v298 = vpop.permute.xlu0 %297
    %299 = vrot.lane.b32.xlu0 %v269, 96
    %v300 = vpop.permute.xlu0 %299
    %301 = vrot.lane.b32.xlu0 %v270, 96
    %v302 = vpop.permute.xlu0 %301
    %303 = vrot.lane.b32.xlu0 %v271, 96
    %v304 = vpop.permute.xlu0 %303
    %313 = vst.msk [vmem:[#allocation2 + $0x20] sm:$0xf] %vm280, %v290
    %314 = vst.msk [vmem:[#allocation2 + $0x24] sm:$0xf] %vm280, %v292
    %315 = vst.msk [vmem:[#allocation2 + $0x28] sm:$0xf] %vm280, %v294
    %316 = vst.msk [vmem:[#allocation2 + $0x2c] sm:$0xf] %vm280, %v296
    %317 = vst.msk [vmem:[#allocation2 + $0x30] sm:$0xf] %vm280, %v298
    %318 = vst.msk [vmem:[#allocation2 + $0x34] sm:$0xf] %vm280, %v300
    %319 = vst.msk [vmem:[#allocation2 + $0x38] sm:$0xf] %vm280, %v302
    %320 = vst.msk [vmem:[#allocation2 + $0x3c] sm:$0xf] %vm280, %v304
    %v321 = vld [vmem:[#allocation2] sm:$0xf]
    %v322 = vld [vmem:[#allocation2 + $0x4] sm:$0xf]
    %v323 = vld [vmem:[#allocation2 + $0x8] sm:$0xf]
    %v324 = vld [vmem:[#allocation2 + $0xc] sm:$0xf]
    %v325 = vld [vmem:[#allocation2 + $0x10] sm:$0xf]
    %v326 = vld [vmem:[#allocation2 + $0x14] sm:$0xf]
    %v327 = vld [vmem:[#allocation2 + $0x18] sm:$0xf]
    %v328 = vld [vmem:[#allocation2 + $0x1c] sm:$0xf]
    %v329 = vld [vmem:[#allocation2 + $0x20] sm:$0xf]
    %v330 = vld [vmem:[#allocation2 + $0x24] sm:$0xf]
    %v331 = vld [vmem:[#allocation2 + $0x28] sm:$0xf]
    %v332 = vld [vmem:[#allocation2 + $0x2c] sm:$0xf]
    %v333 = vld [vmem:[#allocation2 + $0x30] sm:$0xf]
    %v334 = vld [vmem:[#allocation2 + $0x34] sm:$0xf]
    %v335 = vld [vmem:[#allocation2 + $0x38] sm:$0xf]
    %v336 = vld [vmem:[#allocation2 + $0x3c] sm:$0xf]
    %v345 = vunpack.c.l.b16 %v87
    %v346 = vunpack.c.l.b16 %v88
    %v347 = vunpack.c.l.b16 %v89
    %v348 = vunpack.c.l.b16 %v90
    %v349 = vunpack.c.l.b16 %v91
    %v350 = vunpack.c.l.b16 %v92
    %v351 = vunpack.c.l.b16 %v93
    %v352 = vunpack.c.l.b16 %v94
    %v353 = vpack.c.b16 %v346, %v345
    %v354 = vpack.c.b16 %v348, %v347
    %v355 = vpack.c.b16 %v350, %v349
    %v356 = vpack.c.b16 %v352, %v351
    %v377 = vunpack.c.l.b16 %v321
    %v378 = vunpack.c.l.b16 %v322
    %v379 = vunpack.c.l.b16 %v323
    %v380 = vunpack.c.l.b16 %v324
    %v381 = vunpack.c.l.b16 %v325
    %v382 = vunpack.c.l.b16 %v326
    %v383 = vunpack.c.l.b16 %v327
    %v384 = vunpack.c.l.b16 %v328
    %v385 = vunpack.c.l.b16 %v329
    %v386 = vunpack.c.l.b16 %v330
    %v387 = vunpack.c.l.b16 %v331
    %v388 = vunpack.c.l.b16 %v332
    %v389 = vunpack.c.l.b16 %v333
    %v390 = vunpack.c.l.b16 %v334
    %v391 = vunpack.c.l.b16 %v335
    %v392 = vunpack.c.l.b16 %v336
    %v393 = vpack.c.b16 %v378, %v377
    %v394 = vpack.c.b16 %v380, %v379
    %v395 = vpack.c.b16 %v382, %v381
    %v396 = vpack.c.b16 %v384, %v383
    %v397 = vpack.c.b16 %v386, %v385
    %v398 = vpack.c.b16 %v388, %v387
    %v399 = vpack.c.b16 %v390, %v389
    %v400 = vpack.c.b16 %v392, %v391
    %417 = vrot.lane.b32.xlu0 %v218, 64
    %v418 = vpop.permute.xlu0 %417
    %419 = vrot.lane.b32.xlu0 %v221, 64
    %v420 = vpop.permute.xlu0 %419
    %421 = vrot.lane.b32.xlu0 %v226, 64
    %v422 = vpop.permute.xlu0 %421
    %423 = vrot.lane.b32.xlu0 %v229, 64
    %v424 = vpop.permute.xlu0 %423
    %425 = vrot.lane.b32.xlu0 %v234, 64
    %v426 = vpop.permute.xlu0 %425
    %427 = vrot.lane.b32.xlu0 %v237, 64
    %v428 = vpop.permute.xlu0 %427
    %429 = vrot.lane.b32.xlu0 %v242, 64
    %v430 = vpop.permute.xlu0 %429
    %431 = vrot.lane.b32.xlu0 %v245, 64
    %v432 = vpop.permute.xlu0 %431
    %441 = vmatprep.subr.bf16.mxu0 0
    %442 = vmatpush1.bf16.msra.mxu0 %v400
    %443 = vmatprep.subr.bf16.mxu0 0
    %444 = vmatpush1.bf16.msra.mxu0 %v399
    %445 = vmatprep.subr.bf16.mxu0 0
    %446 = vmatpush1.bf16.msra.mxu0 %v398
    %447 = vmatprep.subr.bf16.mxu0 0
    %448 = vmatpush1.bf16.msra.mxu0 %v397
    %449 = vmatprep.subr.bf16.mxu0 0
    %450 = vmatpush1.bf16.msra.mxu0 %v396
    %451 = vmatprep.subr.bf16.mxu0 0
    %452 = vmatpush1.bf16.msra.mxu0 %v395
    %453 = vmatprep.subr.bf16.mxu0 0
    %454 = vmatpush1.bf16.msra.mxu0 %v394
    %455 = vmatprep.subr.bf16.mxu0 0
    %456 = vmatpush1.bf16.msra.mxu0 %v393
    %457 = vmatprep.subr.bf16.mxu0 0
    %458 = vmatpush2.bf16.msra.mxu0 0
    %459 = vmatprep.subr.bf16.mxu0 0
    %460 = vmatpush2.bf16.msra.mxu0 0
    %461 = vmatprep.subr.bf16.mxu0 0
    %462 = vmatpush2.bf16.msra.mxu0 0
    %463 = vmatprep.subr.bf16.mxu0 0
    %464 = vmatpush2.bf16.msra.mxu0 0
    %465 = vmatprep.subr.bf16.mxu0 0
    %466 = vmatpush2.bf16.msra.mxu0 0
    %467 = vmatprep.subr.bf16.mxu0 0
    %468 = vmatpush2.bf16.msra.mxu0 0
    %469 = vmatprep.subr.bf16.mxu0 0
    %470 = vmatpush2.bf16.msra.mxu0 0
    %471 = vmatprep.subr.bf16.mxu0 0
    %472 = vmatpush2.bf16.msra.mxu0 0
    %473 = vmatprep.mubr.bf16.mxu0 0
    %474 = vmatmul.mubr.bf16.gmra.mxu0 %v353
    %v475 = vpop.f32.mrf.mxu0
    %v476 = vadd.f32 %v418, %v475
    %v477 = vpop.f32.mrf.mxu0
    %v478 = vpop.f32.mrf.mxu0
    %v479 = vadd.f32 %v420, %v478
    %v480 = vpop.f32.mrf.mxu0
    %481 = vmatprep.mubr.bf16.mxu0 0
    %482 = vmatmul.mubr.bf16.gmra.mxu0 %v354
    %v483 = vpop.f32.mrf.mxu0
    %v484 = vadd.f32 %v422, %v483
    %v485 = vpop.f32.mrf.mxu0
    %v486 = vpop.f32.mrf.mxu0
    %v487 = vadd.f32 %v424, %v486
    %v488 = vpop.f32.mrf.mxu0
    %489 = vmatprep.mubr.bf16.mxu0 0
    %490 = vmatmul.mubr.bf16.gmra.mxu0 %v355
    %v491 = vpop.f32.mrf.mxu0
    %v492 = vadd.f32 %v426, %v491
    %v493 = vpop.f32.mrf.mxu0
    %v494 = vpop.f32.mrf.mxu0
    %v495 = vadd.f32 %v428, %v494
    %v496 = vpop.f32.mrf.mxu0
    %497 = vmatprep.mubr.bf16.mxu0 0
    %498 = vmatmul.mubr.bf16.gmra.mxu0 %v356
    %v499 = vpop.f32.mrf.mxu0
    %v500 = vadd.f32 %v430, %v499
    %v501 = vpop.f32.mrf.mxu0
    %v502 = vpop.f32.mrf.mxu0
    %v503 = vadd.f32 %v432, %v502
    %v504 = vpop.f32.mrf.mxu0
    %505 = vdwg.mxu0
    %v506 = vld [vmem:[%s3] sm:$0x1]
    %v508 = vlaneseq
    %v509 = vshrl.u32 %v508, 7
    %v510 = vsub.s32 0, %v509
    %v511 = vrot.slane %v506, %v510
    %v513 = vadd.f32 %v476, %v511
    %v514 = vadd.f32 %v479, %v511
    %v515 = vadd.f32 %v484, %v511
    %v516 = vadd.f32 %v487, %v511
    %v517 = vadd.f32 %v492, %v511
    %v518 = vadd.f32 %v495, %v511
    %v519 = vadd.f32 %v500, %v511
    %v520 = vadd.f32 %v503, %v511
    %vm521 = vcmp.gt.f32.partialorder %v513, 0.0
    %vm522 = vcmp.gt.f32.partialorder %v514, 0.0
    %vm523 = vcmp.gt.f32.partialorder %v515, 0.0
    %vm524 = vcmp.gt.f32.partialorder %v516, 0.0
    %vm525 = vcmp.gt.f32.partialorder %v517, 0.0
    %vm526 = vcmp.gt.f32.partialorder %v518, 0.0
    %vm527 = vcmp.gt.f32.partialorder %v519, 0.0
    %vm528 = vcmp.gt.f32.partialorder %v520, 0.0
    %v529 = vmin.f32 %v513, 0.0
    %v530 = vmin.f32 %v514, 0.0
    %v531 = vmin.f32 %v515, 0.0
    %v532 = vmin.f32 %v516, 0.0
    %v533 = vmin.f32 %v517, 0.0
    %v534 = vmin.f32 %v518, 0.0
    %v535 = vmin.f32 %v519, 0.0
    %v536 = vmin.f32 %v520, 0.0
    %v537 = vmul.f32 %v529, 1.442695
    %v538 = vpow.pop %v537
    %v539 = vmul.f32 %v530, 1.442695
    %v540 = vpow.pop %v539
    %v541 = vmul.f32 %v531, 1.442695
    %v542 = vpow.pop %v541
    %v543 = vmul.f32 %v532, 1.442695
    %v544 = vpow.pop %v543
    %v545 = vmul.f32 %v533, 1.442695
    %v546 = vpow.pop %v545
    %v547 = vmul.f32 %v534, 1.442695
    %v548 = vpow.pop %v547
    %v549 = vmul.f32 %v535, 1.442695
    %v550 = vpow.pop %v549
    %v551 = vmul.f32 %v536, 1.442695
    %v552 = vpow.pop %v551
    %v553 = vsub.f32 %v538, 1.0
    %v554 = vsub.f32 %v540, 1.0
    %v555 = vsub.f32 %v542, 1.0
    %v556 = vsub.f32 %v544, 1.0
    %v557 = vsub.f32 %v546, 1.0
    %v558 = vsub.f32 %v548, 1.0
    %v559 = vsub.f32 %v550, 1.0
    %v560 = vsub.f32 %v552, 1.0
    %v561 = vsel %vm521, %v513, %v553
    %v562 = vsel %vm522, %v514, %v554
    %v563 = vsel %vm523, %v515, %v555
    %v564 = vsel %vm524, %v516, %v556
    %v565 = vsel %vm525, %v517, %v557
    %v566 = vsel %vm526, %v518, %v558
    %v567 = vsel %vm527, %v519, %v559
    %v568 = vsel %vm528, %v520, %v560
    %v569 = vpack.c.bf16 %v562, %v561
    %v570 = vpack.c.bf16 %v564, %v563
    %v571 = vpack.c.bf16 %v566, %v565
    %v572 = vpack.c.bf16 %v568, %v567
    %v573 = vld [vmem:[#allocation9] sm:$0xf]
    %v574 = vld [vmem:[#allocation9 + $0x4] sm:$0xf]
    %v577 = vunpack.c.l.b16 %v573
    %v578 = vunpack.c.l.b16 %v574
    %v579 = vpack.c.b16 %v578, %v577
    %vm581 = vcmask 130048
    %v583 = vsel %vm581, %v569, 0
    %v586 = vsel %vm581, %v570, 0
    %v589 = vsel %vm581, %v571, 0
    %v592 = vsel %vm581, %v572, 0
    %594 = vmatprep.subr.bf16.mxu0 0
    %595 = vmatpush1.bf16.msra.mxu0 0
    %596 = vmatprep.subr.bf16.mxu0 0
    %597 = vmatpush1.bf16.msra.mxu0 0
    %598 = vmatprep.subr.bf16.mxu0 0
    %599 = vmatpush1.bf16.msra.mxu0 0
    %600 = vmatprep.subr.bf16.mxu0 0
    %601 = vmatpush1.bf16.msra.mxu0 0
    %602 = vmatprep.subr.bf16.mxu0 0
    %603 = vmatpush1.bf16.msra.mxu0 0
    %604 = vmatprep.subr.bf16.mxu0 0
    %605 = vmatpush1.bf16.msra.mxu0 0
    %606 = vmatprep.subr.bf16.mxu0 0
    %607 = vmatpush1.bf16.msra.mxu0 0
    %608 = vmatprep.subr.bf16.mxu0 0
    %609 = vmatpush1.bf16.msra.mxu0 %v579
    %610 = vmatprep.subr.bf16.mxu0 0
    %611 = vmatpush2.bf16.msra.mxu0 0
    %612 = vmatprep.subr.bf16.mxu0 0
    %613 = vmatpush2.bf16.msra.mxu0 0
    %614 = vmatprep.subr.bf16.mxu0 0
    %615 = vmatpush2.bf16.msra.mxu0 0
    %616 = vmatprep.subr.bf16.mxu0 0
    %617 = vmatpush2.bf16.msra.mxu0 0
    %618 = vmatprep.subr.bf16.mxu0 0
    %619 = vmatpush2.bf16.msra.mxu0 0
    %620 = vmatprep.subr.bf16.mxu0 0
    %621 = vmatpush2.bf16.msra.mxu0 0
    %622 = vmatprep.subr.bf16.mxu0 0
    %623 = vmatpush2.bf16.msra.mxu0 0
    %624 = vmatprep.subr.bf16.mxu0 0
    %625 = vmatpush2.bf16.msra.mxu0 0
    %626 = vmatprep.mubr.bf16.mxu0 0
    %627 = vmatmul.mubr.bf16.gmra.mxu0 %v583
    %v628 = vpop.f32.mrf.mxu0
    %v629 = vadd.f32 0.0, %v628
    %v630 = vpop.f32.mrf.mxu0
    %v631 = vpop.f32.mrf.mxu0
    %v632 = vadd.f32 0.0, %v631
    %v633 = vpop.f32.mrf.mxu0
    %634 = vmatprep.mubr.bf16.mxu0 0
    %635 = vmatmul.mubr.bf16.gmra.mxu0 %v586
    %v636 = vpop.f32.mrf.mxu0
    %v637 = vadd.f32 0.0, %v636
    %v638 = vpop.f32.mrf.mxu0
    %v639 = vpop.f32.mrf.mxu0
    %v640 = vadd.f32 0.0, %v639
    %v641 = vpop.f32.mrf.mxu0
    %642 = vmatprep.mubr.bf16.mxu0 0
    %643 = vmatmul.mubr.bf16.gmra.mxu0 %v589
    %v644 = vpop.f32.mrf.mxu0
    %v645 = vadd.f32 0.0, %v644
    %v646 = vpop.f32.mrf.mxu0
    %v647 = vpop.f32.mrf.mxu0
    %v648 = vadd.f32 0.0, %v647
    %v649 = vpop.f32.mrf.mxu0
    %650 = vmatprep.mubr.bf16.mxu0 0
    %651 = vmatmul.mubr.bf16.gmra.mxu0 %v592
    %v652 = vpop.f32.mrf.mxu0
    %v653 = vadd.f32 0.0, %v652
    %v654 = vpop.f32.mrf.mxu0
    %v655 = vpop.f32.mrf.mxu0
    %v656 = vadd.f32 0.0, %v655
    %v657 = vpop.f32.mrf.mxu0
    %658 = vdwg.mxu0
    %v659 = vpack.c.bf16 %v632, %v629
    %v660 = vpack.c.bf16 %v640, %v637
    %v661 = vpack.c.bf16 %v648, %v645
    %v662 = vpack.c.bf16 %v656, %v653
    %v667 = vunpack.c.l.b16 %v659
    %v668 = vunpack.c.h.b16 %v659
    %v669 = vunpack.c.l.b16 %v660
    %v670 = vunpack.c.h.b16 %v660
    %v671 = vunpack.c.l.b16 %v661
    %v672 = vunpack.c.h.b16 %v661
    %v673 = vunpack.c.l.b16 %v662
    %v674 = vunpack.c.h.b16 %v662
    %v675 = vpack.c.b16 %v667, %v667
    %v676 = vpack.c.b16 %v668, %v668
    %v677 = vpack.c.b16 %v669, %v669
    %v678 = vpack.c.b16 %v670, %v670
    %v679 = vpack.c.b16 %v671, %v671
    %v680 = vpack.c.b16 %v672, %v672
    %v681 = vpack.c.b16 %v673, %v673
    %v682 = vpack.c.b16 %v674, %v674
    %691 = vst.msk [vmem:[#allocation3] sm:$0xf] %vm280, %v675
    %692 = vst.msk [vmem:[#allocation3 + $0x4] sm:$0xf] %vm280, %v676
    %693 = vst.msk [vmem:[#allocation3 + $0x8] sm:$0xf] %vm280, %v677
    %694 = vst.msk [vmem:[#allocation3 + $0xc] sm:$0xf] %vm280, %v678
    %695 = vst.msk [vmem:[#allocation3 + $0x10] sm:$0xf] %vm280, %v679
    %696 = vst.msk [vmem:[#allocation3 + $0x14] sm:$0xf] %vm280, %v680
    %697 = vst.msk [vmem:[#allocation3 + $0x18] sm:$0xf] %vm280, %v681
    %698 = vst.msk [vmem:[#allocation3 + $0x1c] sm:$0xf] %vm280, %v682
    %699 = vrot.lane.b32.xlu0 %v675, 96
    %v700 = vpop.permute.xlu0 %699
    %701 = vrot.lane.b32.xlu0 %v676, 96
    %v702 = vpop.permute.xlu0 %701
    %703 = vrot.lane.b32.xlu0 %v677, 96
    %v704 = vpop.permute.xlu0 %703
    %705 = vrot.lane.b32.xlu0 %v678, 96
    %v706 = vpop.permute.xlu0 %705
    %707 = vrot.lane.b32.xlu0 %v679, 96
    %v708 = vpop.permute.xlu0 %707
    %709 = vrot.lane.b32.xlu0 %v680, 96
    %v710 = vpop.permute.xlu0 %709
    %711 = vrot.lane.b32.xlu0 %v681, 96
    %v712 = vpop.permute.xlu0 %711
    %713 = vrot.lane.b32.xlu0 %v682, 96
    %v714 = vpop.permute.xlu0 %713
    %723 = vst.msk [vmem:[#allocation3 + $0x20] sm:$0xf] %vm280, %v700
    %724 = vst.msk [vmem:[#allocation3 + $0x24] sm:$0xf] %vm280, %v702
    %725 = vst.msk [vmem:[#allocation3 + $0x28] sm:$0xf] %vm280, %v704
    %726 = vst.msk [vmem:[#allocation3 + $0x2c] sm:$0xf] %vm280, %v706
    %727 = vst.msk [vmem:[#allocation3 + $0x30] sm:$0xf] %vm280, %v708
    %728 = vst.msk [vmem:[#allocation3 + $0x34] sm:$0xf] %vm280, %v710
    %729 = vst.msk [vmem:[#allocation3 + $0x38] sm:$0xf] %vm280, %v712
    %730 = vst.msk [vmem:[#allocation3 + $0x3c] sm:$0xf] %vm280, %v714
    %v731 = vld [vmem:[#allocation3] sm:$0xf]
    %v732 = vld [vmem:[#allocation3 + $0x4] sm:$0xf]
    %v733 = vld [vmem:[#allocation3 + $0x8] sm:$0xf]
    %v734 = vld [vmem:[#allocation3 + $0xc] sm:$0xf]
    %v735 = vld [vmem:[#allocation3 + $0x10] sm:$0xf]
    %v736 = vld [vmem:[#allocation3 + $0x14] sm:$0xf]
    %v737 = vld [vmem:[#allocation3 + $0x18] sm:$0xf]
    %v738 = vld [vmem:[#allocation3 + $0x1c] sm:$0xf]
    %v739 = vld [vmem:[#allocation3 + $0x20] sm:$0xf]
    %v740 = vld [vmem:[#allocation3 + $0x24] sm:$0xf]
    %v741 = vld [vmem:[#allocation3 + $0x28] sm:$0xf]
    %v742 = vld [vmem:[#allocation3 + $0x2c] sm:$0xf]
    %v743 = vld [vmem:[#allocation3 + $0x30] sm:$0xf]
    %v744 = vld [vmem:[#allocation3 + $0x34] sm:$0xf]
    %v745 = vld [vmem:[#allocation3 + $0x38] sm:$0xf]
    %v746 = vld [vmem:[#allocation3 + $0x3c] sm:$0xf]
    %v763 = vunpack.c.l.b16 %v731
    %v764 = vunpack.c.l.b16 %v732
    %v765 = vunpack.c.l.b16 %v733
    %v766 = vunpack.c.l.b16 %v734
    %v767 = vunpack.c.l.b16 %v735
    %v768 = vunpack.c.l.b16 %v736
    %v769 = vunpack.c.l.b16 %v737
    %v770 = vunpack.c.l.b16 %v738
    %v771 = vunpack.c.l.b16 %v739
    %v772 = vunpack.c.l.b16 %v740
    %v773 = vunpack.c.l.b16 %v741
    %v774 = vunpack.c.l.b16 %v742
    %v775 = vunpack.c.l.b16 %v743
    %v776 = vunpack.c.l.b16 %v744
    %v777 = vunpack.c.l.b16 %v745
    %v778 = vunpack.c.l.b16 %v746
    %v779 = vpack.c.b16 %v764, %v763
    %v780 = vpack.c.b16 %v766, %v765
    %v781 = vpack.c.b16 %v768, %v767
    %v782 = vpack.c.b16 %v770, %v769
    %v783 = vpack.c.b16 %v772, %v771
    %v784 = vpack.c.b16 %v774, %v773
    %v785 = vpack.c.b16 %v776, %v775
    %v786 = vpack.c.b16 %v778, %v777
    %803 = vrot.lane.b32.xlu0 %v629, 64
    %v804 = vpop.permute.xlu0 %803
    %805 = vrot.lane.b32.xlu0 %v632, 64
    %v806 = vpop.permute.xlu0 %805
    %807 = vrot.lane.b32.xlu0 %v637, 64
    %v808 = vpop.permute.xlu0 %807
    %809 = vrot.lane.b32.xlu0 %v640, 64
    %v810 = vpop.permute.xlu0 %809
    %811 = vrot.lane.b32.xlu0 %v645, 64
    %v812 = vpop.permute.xlu0 %811
    %813 = vrot.lane.b32.xlu0 %v648, 64
    %v814 = vpop.permute.xlu0 %813
    %815 = vrot.lane.b32.xlu0 %v653, 64
    %v816 = vpop.permute.xlu0 %815
    %817 = vrot.lane.b32.xlu0 %v656, 64
    %v818 = vpop.permute.xlu0 %817
    %827 = vmatprep.subr.bf16.mxu0 0
    %828 = vmatpush1.bf16.msra.mxu0 %v786
    %829 = vmatprep.subr.bf16.mxu0 0
    %830 = vmatpush1.bf16.msra.mxu0 %v785
    %831 = vmatprep.subr.bf16.mxu0 0
    %832 = vmatpush1.bf16.msra.mxu0 %v784
    %833 = vmatprep.subr.bf16.mxu0 0
    %834 = vmatpush1.bf16.msra.mxu0 %v783
    %835 = vmatprep.subr.bf16.mxu0 0
    %836 = vmatpush1.bf16.msra.mxu0 %v782
    %837 = vmatprep.subr.bf16.mxu0 0
    %838 = vmatpush1.bf16.msra.mxu0 %v781
    %839 = vmatprep.subr.bf16.mxu0 0
    %840 = vmatpush1.bf16.msra.mxu0 %v780
    %841 = vmatprep.subr.bf16.mxu0 0
    %842 = vmatpush1.bf16.msra.mxu0 %v779
    %843 = vmatprep.subr.bf16.mxu0 0
    %844 = vmatpush2.bf16.msra.mxu0 0
    %845 = vmatprep.subr.bf16.mxu0 0
    %846 = vmatpush2.bf16.msra.mxu0 0
    %847 = vmatprep.subr.bf16.mxu0 0
    %848 = vmatpush2.bf16.msra.mxu0 0
    %849 = vmatprep.subr.bf16.mxu0 0
    %850 = vmatpush2.bf16.msra.mxu0 0
    %851 = vmatprep.subr.bf16.mxu0 0
    %852 = vmatpush2.bf16.msra.mxu0 0
    %853 = vmatprep.subr.bf16.mxu0 0
    %854 = vmatpush2.bf16.msra.mxu0 0
    %855 = vmatprep.subr.bf16.mxu0 0
    %856 = vmatpush2.bf16.msra.mxu0 0
    %857 = vmatprep.subr.bf16.mxu0 0
    %858 = vmatpush2.bf16.msra.mxu0 0
    %859 = vmatprep.mubr.bf16.mxu0 0
    %860 = vmatmul.mubr.bf16.gmra.mxu0 %v353
    %v861 = vpop.f32.mrf.mxu0
    %v862 = vadd.f32 %v804, %v861
    %v863 = vpop.f32.mrf.mxu0
    %v864 = vpop.f32.mrf.mxu0
    %v865 = vadd.f32 %v806, %v864
    %v866 = vpop.f32.mrf.mxu0
    %867 = vmatprep.mubr.bf16.mxu0 0
    %868 = vmatmul.mubr.bf16.gmra.mxu0 %v354
    %v869 = vpop.f32.mrf.mxu0
    %v870 = vadd.f32 %v808, %v869
    %v871 = vpop.f32.mrf.mxu0
    %v872 = vpop.f32.mrf.mxu0
    %v873 = vadd.f32 %v810, %v872
    %v874 = vpop.f32.mrf.mxu0
    %875 = vmatprep.mubr.bf16.mxu0 0
    %876 = vmatmul.mubr.bf16.gmra.mxu0 %v355
    %v877 = vpop.f32.mrf.mxu0
    %v878 = vadd.f32 %v812, %v877
    %v879 = vpop.f32.mrf.mxu0
    %v880 = vpop.f32.mrf.mxu0
    %v881 = vadd.f32 %v814, %v880
    %v882 = vpop.f32.mrf.mxu0
    %883 = vmatprep.mubr.bf16.mxu0 0
    %884 = vmatmul.mubr.bf16.gmra.mxu0 %v356
    %v885 = vpop.f32.mrf.mxu0
    %v886 = vadd.f32 %v816, %v885
    %v887 = vpop.f32.mrf.mxu0
    %v888 = vpop.f32.mrf.mxu0
    %v889 = vadd.f32 %v818, %v888
    %v890 = vpop.f32.mrf.mxu0
    %891 = vdwg.mxu0
    %v892 = vld [vmem:[%s5] sm:$0x1]
    %v894 = vlaneseq
    %v895 = vshrl.u32 %v894, 7
    %v896 = vsub.s32 0, %v895
    %v897 = vrot.slane %v892, %v896
    %v899 = vadd.f32 %v862, %v897
    %v900 = vadd.f32 %v865, %v897
    %v901 = vadd.f32 %v870, %v897
    %v902 = vadd.f32 %v873, %v897
    %v903 = vadd.f32 %v878, %v897
    %v904 = vadd.f32 %v881, %v897
    %v905 = vadd.f32 %v886, %v897
    %v906 = vadd.f32 %v889, %v897
    %v907 = vsel %vm581, %v899, -inf
    %908 = vmax.xlane.f32.xlu0 %v907
    %v909 = vpop.xlane.xlu0 %908
    %v910 = vsel %vm581, %v900, -inf
    %911 = vmax.xlane.f32.xlu0 %v910
    %v912 = vpop.xlane.xlu0 %911
    %v913 = vsel %vm581, %v901, -inf
    %914 = vmax.xlane.f32.xlu0 %v913
    %v915 = vpop.xlane.xlu0 %914
    %v916 = vsel %vm581, %v902, -inf
    %917 = vmax.xlane.f32.xlu0 %v916
    %v918 = vpop.xlane.xlu0 %917
    %v919 = vsel %vm581, %v903, -inf
    %920 = vmax.xlane.f32.xlu0 %v919
    %v921 = vpop.xlane.xlu0 %920
    %v922 = vsel %vm581, %v904, -inf
    %923 = vmax.xlane.f32.xlu0 %v922
    %v924 = vpop.xlane.xlu0 %923
    %v925 = vsel %vm581, %v905, -inf
    %926 = vmax.xlane.f32.xlu0 %v925
    %v927 = vpop.xlane.xlu0 %926
    %v928 = vsel %vm581, %v906, -inf
    %929 = vmax.xlane.f32.xlu0 %v928
    %v930 = vpop.xlane.xlu0 %929
    %v931 = vsub.f32 %v899, %v909
    %v932 = vsub.f32 %v900, %v912
    %v933 = vsub.f32 %v901, %v915
    %v934 = vsub.f32 %v902, %v918
    %v935 = vsub.f32 %v903, %v921
    %v936 = vsub.f32 %v904, %v924
    %v937 = vsub.f32 %v905, %v927
    %v938 = vsub.f32 %v906, %v930
    %v939 = vmul.f32 %v931, 1.442695
    %v940 = vpow.pop %v939
    %v941 = vmul.f32 %v932, 1.442695
    %v942 = vpow.pop %v941
    %v943 = vmul.f32 %v933, 1.442695
    %v944 = vpow.pop %v943
    %v945 = vmul.f32 %v934, 1.442695
    %v946 = vpow.pop %v945
    %v947 = vmul.f32 %v935, 1.442695
    %v948 = vpow.pop %v947
    %v949 = vmul.f32 %v936, 1.442695
    %v950 = vpow.pop %v949
    %v951 = vmul.f32 %v937, 1.442695
    %v952 = vpow.pop %v951
    %v953 = vmul.f32 %v938, 1.442695
    %v954 = vpow.pop %v953
    %v955 = vsel %vm581, %v940, 0.0
    %956 = vadd.xlane.f32.xlu0 %v955
    %v957 = vpop.xlane.xlu0 %956
    %v958 = vsel %vm581, %v942, 0.0
    %959 = vadd.xlane.f32.xlu0 %v958
    %v960 = vpop.xlane.xlu0 %959
    %v961 = vsel %vm581, %v944, 0.0
    %962 = vadd.xlane.f32.xlu0 %v961
    %v963 = vpop.xlane.xlu0 %962
    %v964 = vsel %vm581, %v946, 0.0
    %965 = vadd.xlane.f32.xlu0 %v964
    %v966 = vpop.xlane.xlu0 %965
    %v967 = vsel %vm581, %v948, 0.0
    %968 = vadd.xlane.f32.xlu0 %v967
    %v969 = vpop.xlane.xlu0 %968
    %v970 = vsel %vm581, %v950, 0.0
    %971 = vadd.xlane.f32.xlu0 %v970
    %v972 = vpop.xlane.xlu0 %971
    %v973 = vsel %vm581, %v952, 0.0
    %974 = vadd.xlane.f32.xlu0 %v973
    %v975 = vpop.xlane.xlu0 %974
    %v976 = vsel %vm581, %v954, 0.0
    %977 = vadd.xlane.f32.xlu0 %v976
    %v978 = vpop.xlane.xlu0 %977
    %v979 = vlog2.pop %v957
    %v980 = vmul.f32 %v979, 0.6931472
    %v981 = vlog2.pop %v960
    %v982 = vmul.f32 %v981, 0.6931472
    %v983 = vlog2.pop %v963
    %v984 = vmul.f32 %v983, 0.6931472
    %v985 = vlog2.pop %v966
    %v986 = vmul.f32 %v985, 0.6931472
    %v987 = vlog2.pop %v969
    %v988 = vmul.f32 %v987, 0.6931472
    %v989 = vlog2.pop %v972
    %v990 = vmul.f32 %v989, 0.6931472
    %v991 = vlog2.pop %v975
    %v992 = vmul.f32 %v991, 0.6931472
    %v993 = vlog2.pop %v978
    %v994 = vmul.f32 %v993, 0.6931472
    %v995 = vsub.f32 %v931, %v980
    %v996 = vsub.f32 %v932, %v982
    %v997 = vsub.f32 %v933, %v984
    %v998 = vsub.f32 %v934, %v986
    %v999 = vsub.f32 %v935, %v988
    %v1000 = vsub.f32 %v936, %v990
    %v1001 = vsub.f32 %v937, %v992
    %v1002 = vsub.f32 %v938, %v994
    %1003 = vst.msk [vmem:[%s6] sm:$0xff] %vm581, %v995
    %1004 = vst.msk [vmem:[%s6 + $0x8] sm:$0xff] %vm581, %v996
    %1005 = vst.msk [vmem:[%s6 + $0x10] sm:$0xff] %vm581, %v997
    %1006 = vst.msk [vmem:[%s6 + $0x18] sm:$0xff] %vm581, %v998
    %1007 = vst.msk [vmem:[%s6 + $0x20] sm:$0xff] %vm581, %v999
    %1008 = vst.msk [vmem:[%s6 + $0x28] sm:$0xff] %vm581, %v1000
    %1009 = vst.msk [vmem:[%s6 + $0x30] sm:$0xff] %vm581, %v1001
    %1010 = vst.msk [vmem:[%s6 + $0x38] sm:$0xff] %vm581, %v1002
    // Predicated region
    $region42: #{tpu_custom_call.1} parent=1 // pred_check
      _
    $region43: #{tpu_custom_call.1} parent=1 // pred_check_branch
      %1012 = sbr.rel (0) target = $region45
    $region44: #{tpu_custom_call.1} parent=1 // pred_region
      _
    $region45: #{tpu_custom_call.1} parent=1 // pred_fallthru
      _
    // Predicated region
    $region46: #{tpu_custom_call.1} parent=1 // pred_check
      _
    $region47: #{tpu_custom_call.1} parent=1 // pred_check_branch
      %1014 = sbr.rel (0) target = $region49
    $region48: #{tpu_custom_call.1} parent=1 // pred_region
      _
    $region49: #{tpu_custom_call.1} parent=1 // pred_fallthru
      _
    %1015 = vsyncpa [#allocation5], 1
    %1016 = vsyncpa [#allocation7], 1
    %1017 = vsyncpa [#allocation10], 1

</llo_original>
